<compile_context>
chip_gen: v6e
topology: v6e:2x2x1
jax: 0.10.0
libtpu: 0.0.40
codegen_flags: <defaults>
</compile_context>

<pallas_src>
import functools
import math

import jax
import jax.numpy as jnp
from jax.experimental import pallas as pl
from jax.experimental.pallas import tpu as pltpu


# ----------------------------------------------------------------------------------
# One-time (per-step) weight-side transforms — plain JAX.
# ----------------------------------------------------------------------------------

def weight_quant_ternary(w):
    """BitNet 1.58b: returns (ternary int8 weights, scalar scale); dequant = tern * scale."""
    s = 1.0 / jnp.maximum(jnp.mean(jnp.abs(w)), 1e-5)
    tern = jnp.clip(jnp.round(w * s), -1.0, 1.0)
    return tern.astype(jnp.int8), (1.0 / s).astype(jnp.float32)


def make_sin_cos_tables(dim, max_seq_len, base=10000.0):
    """Same buffers as CosSinRotary.__init__ : (max_seq_len, dim//2)."""
    inv_freq = 1.0 / (base ** (jnp.arange(0, dim, 2, dtype=jnp.float32) / dim))
    pos = jnp.arange(max_seq_len, dtype=jnp.float32)
    freq = jnp.outer(pos, inv_freq)
    return jnp.sin(freq), jnp.cos(freq)


@functools.lru_cache(maxsize=None)
def _vmem_limit_bytes():
    # ~96 MiB on v5e/v6e (128 MiB physical), ~48 MiB on v7x (64 MiB physical);
    # safe fallback when hardware info is unavailable (e.g. interpret mode).
    try:
        cap = int(pltpu.get_tpu_info().vmem_capacity_bytes)
        return max(32 * 1024 * 1024, min(96 * 1024 * 1024, (cap * 3) // 4))
    except Exception:
        return 48 * 1024 * 1024


def _pick_block_rows(n, target=512, min_tiles=4):
    """Largest multiple-of-8 divisor of n that is <= target and leaves >= min_tiles row tiles."""
    cap = min(target, max(8, n // min_tiles))
    for bm in range(cap - cap % 8, 7, -8):
        if n % bm == 0:
            return bm
    return n


def _pick_block_cols(n, target=512):
    """Largest multiple-of-128 divisor of n that is <= target (lane-dense output tiles)."""
    cap = min(target, n)
    for tn in range(cap - cap % 128, 127, -128):
        if n % tn == 0:
            return tn
    return n


# ----------------------------------------------------------------------------------
# BitLinear kernels: RMSNorm -> act int8 fake-quant -> ternary matmul (bf16 MXU), scales post-dot.
# ----------------------------------------------------------------------------------

def _norm_quant_to_scratch(x, g, eps, xq_sc, inv_sc):
    """x: (bm, K) f32, g: (1, K) f32 (weight scale pre-folded).  Writes:
       xq_sc: (bm, K) bf16 integer codes in [-128, 127];  inv_sc: (bm, 1) per-row dequant scale."""
    ms = jnp.mean(x * x, axis=-1, keepdims=True)
    xn = x * jax.lax.rsqrt(ms + eps) * g
    amax = jnp.maximum(jnp.max(jnp.abs(xn), axis=-1, keepdims=True), 1e-5)
    s = 127.0 / amax
    xq_sc[...] = jnp.clip(jnp.round(xn * s), -128.0, 127.0).astype(jnp.bfloat16)
    inv_sc[...] = amax * (1.0 / 127.0)


def _int_matmul_scaled(xq_sc, inv_sc, w_ref):
    # bf16 integer codes x bf16 ternary -> exact integer products, f32 accumulation on the MXU.
    acc = jnp.dot(xq_sc[...], w_ref[...].astype(jnp.bfloat16),
                  preferred_element_type=jnp.float32)
    return acc * inv_sc[...]


def _bit_linear_kernel(x_ref, g_ref, w_ref, o_ref, xq_sc, inv_sc, *, eps):
    @pl.when(pl.program_id(1) == 0)
    def _():
        _norm_quant_to_scratch(x_ref[...].astype(jnp.float32),
                               g_ref[...].astype(jnp.float32), eps, xq_sc, inv_sc)
    o_ref[...] = _int_matmul_scaled(xq_sc, inv_sc, w_ref).astype(o_ref.dtype)


def _bit_linear_res_kernel(x_ref, g_ref, w_ref, r_ref, o_ref, xq_sc, inv_sc, *, eps):
    @pl.when(pl.program_id(1) == 0)
    def _():
        _norm_quant_to_scratch(x_ref[...].astype(jnp.float32),
                               g_ref[...].astype(jnp.float32), eps, xq_sc, inv_sc)
    y = _int_matmul_scaled(xq_sc, inv_sc, w_ref)
    o_ref[...] = (r_ref[...].astype(jnp.float32) + y).astype(o_ref.dtype)


def _swiglu_bit_linear_res_kernel(up_ref, gate_ref, g_ref, w_ref, r_ref, o_ref,
                                  hq_sc, inv_sc, *, eps):
    @pl.when(pl.program_id(1) == 0)
    def _():
        up = up_ref[...].astype(jnp.float32)
        gate = gate_ref[...].astype(jnp.float32)
        h = (gate * jax.nn.sigmoid(gate)) * up          # silu(gate) * up
        _norm_quant_to_scratch(h, g_ref[...].astype(jnp.float32), eps, hq_sc, inv_sc)
    z = _int_matmul_scaled(hq_sc, inv_sc, w_ref)
    o_ref[...] = (r_ref[...].astype(jnp.float32) + z).astype(o_ref.dtype)


def bit_linear(x, g_eff, w_tern, *, eps=1e-6, residual=None, block_rows=512, block_cols=512):
    """y = act_quant(rmsnorm(x) * g_eff) @ w_tern  (+ residual).
       x: (N, K) float; g_eff: (K,) = rmsnorm gain * weight scale; w_tern: (K, No) int8 ternary."""
    N, K = x.shape
    Kw, No = w_tern.shape
    assert Kw == K
    bm = _pick_block_rows(N, block_rows)
    tn = _pick_block_cols(No, block_cols)
    grid = (N // bm, No // tn)

    in_specs = [
        pl.BlockSpec((bm, K), lambda i, j: (i, 0)),
        pl.BlockSpec((1, K), lambda i, j: (0, 0)),
        pl.BlockSpec((K, tn), lambda i, j: (0, j)),
    ]
    args = [x, g_eff.reshape(1, K), w_tern]
    if residual is None:
        kernel = functools.partial(_bit_linear_kernel, eps=eps)
    else:
        kernel = functools.partial(_bit_linear_res_kernel, eps=eps)
        in_specs.append(pl.BlockSpec((bm, tn), lambda i, j: (i, j)))
        args.append(residual)

    return pl.pallas_call(
        kernel,
        out_shape=jax.ShapeDtypeStruct((N, No), x.dtype),
        grid=grid,
        in_specs=in_specs,
        out_specs=pl.BlockSpec((bm, tn), lambda i, j: (i, j)),
        scratch_shapes=[pltpu.VMEM((bm, K), jnp.bfloat16),
                        pltpu.VMEM((bm, 1), jnp.float32)],
        compiler_params=pltpu.CompilerParams(
            dimension_semantics=("parallel", "arbitrary"),
            vmem_limit_bytes=_vmem_limit_bytes(),
        ),
    )(*args)


def swiglu_bit_linear(y, g_eff, w_tern, residual, *, eps=1e-6, block_rows=512, block_cols=512):
    """out = residual + BitLinear(silu(gate)*up), [up, gate] = split(y, 2, -1); y: (N, 2*hidden)."""
    N, two_h = y.shape
    hidden = two_h // 2
    K, No = w_tern.shape
    assert K == hidden and residual.shape == (N, No)
    bm = _pick_block_rows(N, block_rows)
    tn = _pick_block_cols(No, block_cols)
    grid = (N // bm, No // tn)

    kernel = functools.partial(_swiglu_bit_linear_res_kernel, eps=eps)
    return pl.pallas_call(
        kernel,
        out_shape=jax.ShapeDtypeStruct((N, No), residual.dtype),
        grid=grid,
        in_specs=[
            pl.BlockSpec((bm, hidden), lambda i, j: (i, 0)),   # up   = first half of y
            pl.BlockSpec((bm, hidden), lambda i, j: (i, 1)),   # gate = second half of y
            pl.BlockSpec((1, hidden), lambda i, j: (0, 0)),
            pl.BlockSpec((hidden, tn), lambda i, j: (0, j)),
            pl.BlockSpec((bm, tn), lambda i, j: (i, j)),
        ],
        out_specs=pl.BlockSpec((bm, tn), lambda i, j: (i, j)),
        scratch_shapes=[pltpu.VMEM((bm, hidden), jnp.bfloat16),
                        pltpu.VMEM((bm, 1), jnp.float32)],
        compiler_params=pltpu.CompilerParams(
            dimension_semantics=("parallel", "arbitrary"),
            vmem_limit_bytes=_vmem_limit_bytes(),
        ),
    )(y, y, g_eff.reshape(1, hidden), w_tern, residual)


# ----------------------------------------------------------------------------------
# Flash attention with fused rotary embedding, reading q/k/v straight out of the qkv buffer.
# ----------------------------------------------------------------------------------

def _attn_rope_kernel(cosq_ref, sinq_ref, cosk_ref, sink_ref,
                      q_ref, k_ref, v_ref, o_ref,
                      q_sc, m_sc, l_sc, acc_sc):
    ki = pl.program_id(3)
    d2 = q_ref.shape[-1] // 2

    def rope(x, cos_f, sin_f):
        # sign-folded tables: cos_f=[cos,cos], sin_f=[sin,-sin]; swapping the halves of x gives
        # [x2,x1], so x*cos_f + swap(x)*sin_f = [x1*cos + x2*sin, -x1*sin + x2*cos].
        x_swap = jnp.concatenate([x[:, d2:], x[:, :d2]], axis=-1)
        return x * cos_f + x_swap * sin_f

    @pl.when(ki == 0)
    def _():
        m_sc[...] = jnp.full(m_sc.shape, -jnp.inf, dtype=jnp.float32)
        l_sc[...] = jnp.zeros(l_sc.shape, dtype=jnp.float32)
        acc_sc[...] = jnp.zeros(acc_sc.shape, dtype=jnp.float32)
        # q rotation (softmax scale folded into the q-side tables) hoisted out of the k loop.
        q = rope(q_ref[...].astype(jnp.float32), cosq_ref[...], sinq_ref[...])
        q_sc[...] = q.astype(jnp.bfloat16)

    k = rope(k_ref[...].astype(jnp.float32), cosk_ref[...], sink_ref[...])

    s = jax.lax.dot_general(q_sc[...], k.astype(jnp.bfloat16),
                            (((1,), (1,)), ((), ())),
                            preferred_element_type=jnp.float32)          # (bq, bk)

    m_prev = m_sc[...]
    m_new = jnp.maximum(m_prev, jnp.max(s, axis=-1, keepdims=True))
    alpha = jnp.exp(m_prev - m_new)
    p = jnp.exp(s - m_new)
    l_sc[...] = alpha * l_sc[...] + jnp.sum(p, axis=-1, keepdims=True)
    acc_sc[...] = alpha * acc_sc[...] + jnp.dot(
        p.astype(jnp.bfloat16), v_ref[...].astype(jnp.bfloat16),
        preferred_element_type=jnp.float32)
    m_sc[...] = m_new

    @pl.when(ki == pl.num_programs(3) - 1)
    def _():
        o_ref[...] = (acc_sc[...] * (1.0 / l_sc[...])).astype(o_ref.dtype)


def flash_attention_rope(qkv, cos_f, sin_f, *, B, S, H, Dh, sm_scale, out_dtype,
                         block_q=256, block_k=256):
    """qkv: (B*S, 3*H*Dh); cos_f/sin_f: (S, Dh) sign-folded tables.  Returns (B*S, H*Dh)."""
    N = B * S
    bq = min(block_q, S)
    bk = min(block_k, S)
    assert S % bq == 0 and S % bk == 0
    qT, kT = S // bq, S // bk

    cos_q = (cos_f * sm_scale).astype(jnp.float32)   # fold softmax scale into q-side rotation
    sin_q = (sin_f * sm_scale).astype(jnp.float32)
    cos_k = cos_f.astype(jnp.float32)
    sin_k = sin_f.astype(jnp.float32)

    tab_q = pl.BlockSpec((bq, Dh), lambda b, h, qi, ki: (qi, 0))
    tab_k = pl.BlockSpec((bk, Dh), lambda b, h, qi, ki: (ki, 0))
    # q/k/v are column blocks of the (N, 3*H*Dh) qkv buffer — no wrapper transposes.
    q_spec = pl.BlockSpec((bq, Dh), lambda b, h, qi, ki: (b * qT + qi, h))
    k_spec = pl.BlockSpec((bk, Dh), lambda b, h, qi, ki: (b * kT + ki, H + h))
    v_spec = pl.BlockSpec((bk, Dh), lambda b, h, qi, ki: (b * kT + ki, 2 * H + h))
    out_spec = pl.BlockSpec((bq, Dh), lambda b, h, qi, ki: (b * qT + qi, h))

    return pl.pallas_call(
        _attn_rope_kernel,
        out_shape=jax.ShapeDtypeStruct((N, H * Dh), out_dtype),
        grid=(B, H, qT, kT),
        in_specs=[tab_q, tab_q, tab_k, tab_k, q_spec, k_spec, v_spec],
        out_specs=out_spec,
        scratch_shapes=[
            pltpu.VMEM((bq, Dh), jnp.bfloat16),   # rotated, scaled q (hoisted)
            pltpu.VMEM((bq, 1), jnp.float32),     # running max
            pltpu.VMEM((bq, 1), jnp.float32),     # running sum
            pltpu.VMEM((bq, Dh), jnp.float32),    # accumulator
        ],
        compiler_params=pltpu.CompilerParams(
            dimension_semantics=("parallel", "parallel", "parallel", "arbitrary"),
            vmem_limit_bytes=_vmem_limit_bytes(),
        ),
    )(cos_q, sin_q, cos_k, sin_k, qkv, qkv, qkv)


# ----------------------------------------------------------------------------------
# Full BitBertBlock forward.
# ----------------------------------------------------------------------------------

def bit_bert_block_forward(x, mask, params, position_ids, *, eps=1e-6, dropout_p=0.0):
    assert dropout_p == 0.0  # TODO(synk): see module header.
    del mask  # TODO(synk): PyTorch mask is a per-query-row constant => softmax no-op (see header).
    B, S, Dm = x.shape
    H = params["n_heads"]
    Dh = Dm // H
    N = B * S
    x2 = x.reshape(N, Dm)

    # ---- self-attention ----
    qkv = bit_linear(x2, params["qkv_g"] * params["qkv_scale"], params["qkv_w"], eps=eps)

    sin_sel = params["sin_tab"][position_ids][:S]
    cos_sel = params["cos_tab"][position_ids][:S]
    cos_f = jnp.concatenate([cos_sel, cos_sel], axis=-1).astype(jnp.float32)    # (S, Dh)
    sin_f = jnp.concatenate([sin_sel, -sin_sel], axis=-1).astype(jnp.float32)   # sign-folded

    attn2 = flash_attention_rope(qkv, cos_f, sin_f, B=B, S=S, H=H, Dh=Dh,
                                 sm_scale=1.0 / math.sqrt(Dh), out_dtype=x.dtype)  # (N, Dm)

    x1 = bit_linear(attn2, params["o_g"] * params["o_scale"], params["o_w"],
                    eps=eps, residual=x2)

    # ---- MLP ----
    y = bit_linear(x1, params["in_g"] * params["in_scale"], params["in_w"], eps=eps)
    out = swiglu_bit_linear(y, params["out_g"] * params["out_scale"], params["out_w"], x1, eps=eps)
    return out.reshape(B, S, Dm)


def init_params(key, d_model, n_heads, hidden_dim, max_seq_len):
    head_dim = d_model // n_heads
    k1, k2, k3, k4 = jax.random.split(key, 4)

    def trunc_w(k, out_f, in_f):
        return 0.002 * jax.random.truncated_normal(k, -2.0, 2.0, (out_f, in_f), dtype=jnp.float32)

    def pack(w):
        tern, scale = weight_quant_ternary(w)
        return tern.T, scale                    # (in, out) int8 ternary, scalar scale

    qkv_w, qkv_s = pack(trunc_w(k1, 3 * d_model, d_model))
    o_w, o_s = pack(trunc_w(k2, d_model, d_model))
    in_w, in_s = pack(trunc_w(k3, 2 * hidden_dim, d_model))
    out_w, out_s = pack(trunc_w(k4, d_model, hidden_dim))

    sin_tab, cos_tab = make_sin_cos_tables(head_dim, max_seq_len)

    return {
        "n_heads": n_heads,
        "qkv_w": qkv_w, "qkv_scale": qkv_s, "qkv_g": jnp.ones((d_model,), jnp.float32),
        "o_w": o_w, "o_scale": o_s, "o_g": jnp.ones((d_model,), jnp.float32),
        "in_w": in_w, "in_scale": in_s, "in_g": jnp.ones((d_model,), jnp.float32),
        "out_w": out_w, "out_scale": out_s, "out_g": jnp.ones((hidden_dim,), jnp.float32),
        "sin_tab": sin_tab, "cos_tab": cos_tab,
    }


# ----------------------------------------------------------------------------------
# Pure-JAX reference (mirrors the PyTorch forward semantics).
# ----------------------------------------------------------------------------------

_HI = jax.lax.Precision.HIGHEST


def _ref_bit_linear(x, g, w_deq, eps):
    xn = x * jax.lax.rsqrt(jnp.mean(x * x, axis=-1, keepdims=True) + eps) * g
    s = 127.0 / jnp.maximum(jnp.max(jnp.abs(xn), axis=-1, keepdims=True), 1e-5)
    xq = jnp.clip(jnp.round(xn * s), -128.0, 127.0) / s
    return jnp.dot(xq, w_deq, precision=_HI)


def _ref_rotate(x, sin, cos):
    d2 = x.shape[-1] // 2
    x1, x2 = x[..., :d2], x[..., d2:]
    return jnp.concatenate([x1 * cos + x2 * sin, -x1 * sin + x2 * cos], axis=-1)


def _deq(params, name):
    return params[name + "_w"].astype(jnp.float32) * params[name + "_scale"]


def ref_block(x, mask, params, position_ids, eps=1e-6):
    B, S, Dm = x.shape
    H = params["n_heads"]
    Dh = Dm // H
    x2 = x.reshape(B * S, Dm)
    qkv = _ref_bit_linear(x2, params["qkv_g"], _deq(params, "qkv"), eps)
    q, k, v = jnp.split(qkv, 3, axis=-1)
    q, k, v = (t.reshape(B, S, H, Dh) for t in (q, k, v))
    sin = params["sin_tab"][position_ids][:S][None, :, None, :]
    cos = params["cos_tab"][position_ids][:S][None, :, None, :]
    q, k = _ref_rotate(q, sin, cos), _ref_rotate(k, sin, cos)
    q, k, v = (t.transpose(0, 2, 1, 3) for t in (q, k, v))
    s = jnp.einsum("bhqd,bhkd->bhqk", q, k, precision=_HI) / math.sqrt(Dh)
    s = s + jnp.where(mask.astype(bool), 0.0, -1e9)[:, None, :, None]
    p = jax.nn.softmax(s, axis=-1)
    o = jnp.einsum("bhqk,bhkd->bhqd", p, v, precision=_HI)
    o = o.transpose(0, 2, 1, 3).reshape(B * S, Dm)
    x1 = x2 + _ref_bit_linear(o, params["o_g"], _deq(params, "o"), eps)
    y = _ref_bit_linear(x1, params["in_g"], _deq(params, "in"), eps)
    hidden = y.shape[-1] // 2
    up, gate = y[:, :hidden], y[:, hidden:]
    out = x1 + _ref_bit_linear(jax.nn.silu(gate) * up, params["out_g"], _deq(params, "out"), eps)
    return out.reshape(B, S, Dm)


# ----------------------------------------------------------------------------------

if __name__ == "__main__":
    B, S = 2, 128
    d_model, n_heads = 256, 2          # head_dim = 128 (lane-dense attention tiles)
    hidden_dim = 3 * d_model           # BitBertBlock builds mlp with hidden = 3 * d_model
    max_seq_len = 256

    key = jax.random.PRNGKey(0)
    kx, kp = jax.random.split(key)
    x = jax.random.normal(kx, (B, S, d_model), dtype=jnp.float32)
    mask = jnp.ones((B, S), dtype=jnp.float32)
    position_ids = jnp.arange(S, dtype=jnp.int32)

    params = init_params(kp, d_model, n_heads, hidden_dim, max_seq_len)

    out = bit_bert_block_forward(x, mask, params, position_ids, dropout_p=0.0)
    out = jax.block_until_ready(out)

    ref = ref_block(x, mask, params, position_ids)
    assert out.shape == (B, S, d_model)
    max_err = float(jnp.max(jnp.abs(out - ref)))
    assert jnp.allclose(out, ref, atol=2e-3, rtol=2e-3), f"mismatch, max abs err {max_err}"

    print("KERNEL_OK")
</pallas_src>

<mosaic_0001>
module attributes {stable_mosaic.version = 11 : i64} {
  func.func @_bit_linear_kernel(%arg0: i32, %arg1: i32, %arg2: memref<64x256xf32, #tpu.memory_space<vmem>>, %arg3: memref<1x256xf32, #tpu.memory_space<vmem>>, %arg4: memref<256x384xi8, #tpu.memory_space<vmem>>, %arg5: memref<64x384xf32, #tpu.memory_space<vmem>>, %arg6: memref<64x256xbf16, #tpu.memory_space<vmem>>, %arg7: memref<64x1xf32, #tpu.memory_space<vmem>>) attributes {dimension_semantics = [#tpu.dimension_semantics<parallel>, #tpu.dimension_semantics<arbitrary>], iteration_bounds = array<i64: 4, 2>, scalar_prefetch = 0 : i64, scratch_operands = 2 : i64, tpu.core_type = #tpu.core_type<tc>, window_params = [{transform_indices = @transform_0, window_bounds = array<i64: 64, 256>}, {pipeline_mode = #tpu.pipeline_mode<synchronous>, transform_indices = @transform_1, window_bounds = array<i64: 1, 256>}, {transform_indices = @transform_2, window_bounds = array<i64: 256, 384>}, {transform_indices = @transform_3, window_bounds = array<i64: 64, 384>}]} {
    %c0_i32 = arith.constant 0 : i32
    %0 = arith.cmpi eq, %arg1, %c0_i32 : i32
    %1 = arith.extui %0 : i1 to i32
    %c0_i32_0 = arith.constant 0 : i32
    %2 = arith.cmpi ne, %1, %c0_i32_0 : i32
    scf.if %2 {
      %c0_8 = arith.constant 0 : index
      %c0_9 = arith.constant 0 : index
      %11 = vector.load %arg2[%c0_8, %c0_9] : memref<64x256xf32, #tpu.memory_space<vmem>>, vector<64x256xf32>
      %c0_10 = arith.constant 0 : index
      %c0_11 = arith.constant 0 : index
      %12 = vector.load %arg3[%c0_10, %c0_11] : memref<1x256xf32, #tpu.memory_space<vmem>>, vector<1x256xf32>
      %13 = arith.mulf %11, %11 : vector<64x256xf32>
      %cst_12 = arith.constant dense<0.000000e+00> : vector<64xf32>
      %14 = vector.multi_reduction <add>, %13, %cst_12 [1] : vector<64x256xf32> to vector<64xf32>
      %15 = vector.shape_cast %14 : vector<64xf32> to vector<64x1xf32>
      %cst_13 = arith.constant 2.560000e+02 : f32
      %16 = vector.broadcast %cst_13 : f32 to vector<64x1xf32>
      %17 = arith.divf %15, %16 : vector<64x1xf32>
      %cst_14 = arith.constant 9.99999997E-7 : f32
      %18 = vector.broadcast %cst_14 : f32 to vector<64x1xf32>
      %19 = arith.addf %17, %18 : vector<64x1xf32>
      %20 = math.rsqrt %19 : vector<64x1xf32>
      %21 = vector.broadcast %20 : vector<64x1xf32> to vector<64x256xf32>
      %22 = arith.mulf %11, %21 : vector<64x256xf32>
      %23 = vector.broadcast %12 : vector<1x256xf32> to vector<64x256xf32>
      %24 = arith.mulf %22, %23 : vector<64x256xf32>
      %25 = math.absf %24 : vector<64x256xf32>
      %cst_15 = arith.constant dense<0xFF800000> : vector<64xf32>
      %26 = vector.multi_reduction <maximumf>, %25, %cst_15 [1] : vector<64x256xf32> to vector<64xf32>
      %27 = vector.shape_cast %26 : vector<64xf32> to vector<64x1xf32>
      %cst_16 = arith.constant 9.99999974E-6 : f32
      %28 = vector.broadcast %cst_16 : f32 to vector<64x1xf32>
      %29 = arith.maximumf %27, %28 : vector<64x1xf32>
      %cst_17 = arith.constant 1.270000e+02 : f32
      %30 = vector.broadcast %cst_17 : f32 to vector<64x1xf32>
      %31 = arith.divf %30, %29 : vector<64x1xf32>
      %32 = vector.broadcast %31 : vector<64x1xf32> to vector<64x256xf32>
      %33 = arith.mulf %24, %32 : vector<64x256xf32>
      %34 = math.roundeven %33 : vector<64x256xf32>
      %cst_18 = arith.constant -1.280000e+02 : f32
      %cst_19 = arith.constant 1.270000e+02 : f32
      %35 = vector.broadcast %cst_18 : f32 to vector<64x256xf32>
      %36 = arith.maximumf %35, %34 : vector<64x256xf32>
      %37 = vector.broadcast %cst_19 : f32 to vector<64x256xf32>
      %38 = arith.minimumf %37, %36 : vector<64x256xf32>
      %39 = arith.truncf %38 : vector<64x256xf32> to vector<64x256xbf16>
      %c0_20 = arith.constant 0 : index
      %c0_21 = arith.constant 0 : index
      %40 = vector.load %arg6[%c0_20, %c0_21] : memref<64x256xbf16, #tpu.memory_space<vmem>>, vector<64x256xbf16>
      tpu.vector_store %arg6[%c0_20, %c0_21], %39 {strides = array<i32>} : memref<64x256xbf16, #tpu.memory_space<vmem>>, vector<64x256xbf16>,
      %cst_22 = arith.constant 0.00787401571 : f32
      %41 = vector.broadcast %cst_22 : f32 to vector<64x1xf32>
      %42 = arith.mulf %29, %41 : vector<64x1xf32>
      %c0_23 = arith.constant 0 : index
      %c0_24 = arith.constant 0 : index
      %43 = vector.load %arg7[%c0_23, %c0_24] : memref<64x1xf32, #tpu.memory_space<vmem>>, vector<64x1xf32>
      tpu.vector_store %arg7[%c0_23, %c0_24], %42 {strides = array<i32>} : memref<64x1xf32, #tpu.memory_space<vmem>>, vector<64x1xf32>,
    } else {
    }
    %c0 = arith.constant 0 : index
    %c0_1 = arith.constant 0 : index
    %3 = vector.load %arg6[%c0, %c0_1] : memref<64x256xbf16, #tpu.memory_space<vmem>>, vector<64x256xbf16>
    %c0_2 = arith.constant 0 : index
    %c0_3 = arith.constant 0 : index
    %4 = vector.load %arg4[%c0_2, %c0_3] : memref<256x384xi8, #tpu.memory_space<vmem>>, vector<256x384xi8>
    %5 = arith.sitofp %4 : vector<256x384xi8> to vector<256x384xbf16>
    %cst = arith.constant dense<0.000000e+00> : vector<64x384xf32>
    %6 = tpu.matmul %3, %5, %cst {dimension_numbers = #tpu.dot_dimension_numbers<[1], [0], [0], [1], [0, 0, 1, 1], [], []>} : vector<64x256xbf16>, vector<256x384xbf16>, vector<64x384xf32> -> vector<64x384xf32>
    %c0_4 = arith.constant 0 : index
    %c0_5 = arith.constant 0 : index
    %7 = vector.load %arg7[%c0_4, %c0_5] : memref<64x1xf32, #tpu.memory_space<vmem>>, vector<64x1xf32>
    %8 = vector.broadcast %7 : vector<64x1xf32> to vector<64x384xf32>
    %9 = arith.mulf %6, %8 : vector<64x384xf32>
    %c0_6 = arith.constant 0 : index
    %c0_7 = arith.constant 0 : index
    %10 = vector.load %arg5[%c0_6, %c0_7] : memref<64x384xf32, #tpu.memory_space<vmem>>, vector<64x384xf32>
    tpu.vector_store %arg5[%c0_6, %c0_7], %9 {strides = array<i32>} : memref<64x384xf32, #tpu.memory_space<vmem>>, vector<64x384xf32>,
    return
  }
  func.func @transform_0(%arg0: i32, %arg1: i32) -> (i32, i32) {
    %c0_i32 = arith.constant 0 : i32
    %c0_i32_0 = arith.constant 0 : i32
    return %arg0, %c0_i32 : i32, i32
  }
  func.func @transform_1(%arg0: i32, %arg1: i32) -> (i32, i32) {
    %c0_i32 = arith.constant 0 : i32
    %c0_i32_0 = arith.constant 0 : i32
    %c0_i32_1 = arith.constant 0 : i32
    return %c0_i32, %c0_i32_0 : i32, i32
  }
  func.func @transform_2(%arg0: i32, %arg1: i32) -> (i32, i32) {
    %c0_i32 = arith.constant 0 : i32
    %c0_i32_0 = arith.constant 0 : i32
    return %c0_i32, %arg1 : i32, i32
  }
  func.func @transform_3(%arg0: i32, %arg1: i32) -> (i32, i32) {
    %c0_i32 = arith.constant 0 : i32
    return %arg0, %arg1 : i32, i32
  }
}

</mosaic_0001>

<llo_original>
// kernel: tpu_custom_call.1
$region0: #{tpu_custom_call.1}
  #allocation0 [shape = 'u32[]', space=smem, size = 0x4, offset = 0x4, fixed_abs, tag = 'smem constant byte address 0x4 - core index']
  #allocation1 [shape = 'u32[144,128]{1,0:T(1,128)}', space=vmem, size = 0x12000, scoped, tag = 'internal scratch']
  #allocation2 [shape = 'bf16[64,256]{1,0:T(8,128)(2,1)}', space=vmem, size = 0x8000, scoped, tag = 'scratch operand']
  #allocation3 [shape = 'f32[64,1]{1,0:T(8,128)}', space=vmem, size = 0x8000, scoped, tag = 'scratch operand']
  %s0 = inlined_call_operand.hbm [shape: f32[256,256], index: 0, kind: input, shape index: {}]
  %s1 = inlined_call_operand.hbm [shape: f32[1,256], index: 1, kind: input, shape index: {}]
  %s2 = inlined_call_operand.hbm [shape: s8[256,768], index: 2, kind: input, shape index: {}]
  %s3 = inlined_call_operand.hbm [shape: f32[256,768], index: 3, kind: output, shape index: {}]
  %s4 = sld [smem:[#allocation0]]
  $region61: #{tpu_custom_call.1} parent=0
    _
  %s6 = ssub.s32 1, %s4
  %s7 = scalar_select 0, %s6, %s4
  $region1: #{tpu_custom_call.1} parent=0
    #allocation4 [shape = 'u8[131072]{0}', space=vmem, size = 0x20000, scoped, tag = 'input window, operand 0']
    #allocation5 [shape = 's32[2]{0}', space=sflag, size = 0x8, scoped, tag = 'scoped memory for tpu_custom_call.1']
    #allocation6 [shape = 's32[2]{0}', space=sflag, size = 0x8, scoped, tag = 'scoped memory for tpu_custom_call.1']
    #allocation7 [shape = 'u8[1024]{0}', space=vmem, size = 0x400, scoped, tag = 'input window, operand 1, single buffered']
    #allocation8 [shape = 's32[1]{0}', space=sflag, size = 0x4, scoped, tag = 'scoped memory for tpu_custom_call.1']
    #allocation9 [shape = 'u8[196608]{0}', space=vmem, size = 0x30000, scoped, tag = 'input window, operand 2']
    #allocation10 [shape = 'u8[196608]{0}', space=vmem, size = 0x30000, scoped, tag = 'output window, operand 0']
    %8 = vsyncpa [#allocation5], 0
    %s9 = scalar_lea.sflag [#allocation5], 1
    %10 = vsyncpa %s9, 0
    %11 = vsyncpa [#allocation8], 0
    %12 = vsyncpa [#allocation6], 0
    %s13 = scalar_lea.sflag [#allocation6], 1
    %14 = vsyncpa %s13, 0
    loop: start=0, step=1, limit=10
    $region2: #{tpu_custom_call.1} parent=1 // loop_pre_header
      _
    $region3: #{tpu_custom_call.1} parent=1 // loop_header
      %s16 = sphi 0, %s20
      %p17 = scmp.ge.s32.totalorder %s16, 10
      %s23 = sphi 0, %s35
      %s24 = sphi 0, %s31
      %s25 = sphi 0, %s23
      %s26 = sphi 0, %s24
      %s27 = sphi 0, %s25
      %s28 = sphi 0, %s26
      %s38 = sphi 0, %s40
      %s41 = sphi 0, %s38
      %s42 = sphi 0, %s41
      %s58 = sphi 0, %s42
      %s62 = sphi 0, %s62
      %s64 = sphi 0, %s62
      %s65 = sphi 0, %s64
      %s79 = sphi 0, %s65
      %s85 = sphi 0, %s87
      %s88 = sphi 0, %s85
      %s89 = sphi 0, %s88
      %s105 = sphi 0, %s89
      %s113 = sphi 0, %s115
      %s116 = sphi 0, %s113
      %s117 = sphi 0, %s116
      %s133 = sphi 0, %s117
    $region4: #{tpu_custom_call.1} parent=1 // loop_header_branch
      %19 = sbr.rel (%p17) target = $region8
    $region5: #{tpu_custom_call.1} parent=1 // loop_body
      %s21 = ssub.s32 %s16, 1
      %s22 = ssub.s32 %s16, 2
      %s29 = sadd.s32 1, %s24
      %p30 = scmp.ge.s32.totalorder %s29, 2
      %s31 = scalar_select %p30, 0, %s29
      %s32 = sadd.s32 1, %s23
      %s33 = scalar_select %p30, %s32, %s23
      %p34 = scmp.ge.s32.totalorder %s33, 4
      %s35 = scalar_select %p34, 0, %s33
      %s36 = ssub.s32 %s23, %s35
      %p37 = scmp.eq.s32.totalorder %s36, 0
      %s39 = sadd.s32 %s38, 1
      %s40 = scalar_select %p37, %s38, %s39
      %p43 = pneg %p37
      %p44 = scmp.eq.s32.totalorder %s16, 7
      %p45 = por %p43, %p44
      %p46 = scmp.ne.s32.totalorder %s38, %s41
      %p47 = scmp.eq.s32.totalorder %s16, 0
      %p48 = por %p46, %p47
      %p49 = scmp.ne.s32.totalorder %s38, %s41
      %p50 = scmp.eq.s32.totalorder %s21, 7
      %p51 = por %p49, %p50
      %p52 = scmp.ne.s32.totalorder %s41, %s42
      %p53 = scmp.eq.s32.totalorder %s21, 0
      %p54 = por %p52, %p53
      %p55 = scmp.ne.s32.totalorder %s41, %s42
      %p56 = scmp.eq.s32.totalorder %s22, 7
      %p57 = por %p55, %p56
      %p59 = scmp.ne.s32.totalorder %s42, %s58
      %p60 = scmp.eq.s32.totalorder %s22, 0
      %p61 = por %p59, %p60
      %s63 = sadd.s32 %s62, 1
      %p66 = scmp.eq.s32.totalorder %s16, 7
      %p67 = scmp.ne.s32.totalorder %s62, %s64
      %p68 = scmp.eq.s32.totalorder %s16, 0
      %p69 = por %p67, %p68
      %p70 = scmp.ne.s32.totalorder %s62, %s64
      %p71 = scmp.eq.s32.totalorder %s21, 7
      %p72 = por %p70, %p71
      %p73 = scmp.ne.s32.totalorder %s64, %s65
      %p74 = scmp.eq.s32.totalorder %s21, 0
      %p75 = por %p73, %p74
      %p76 = scmp.ne.s32.totalorder %s64, %s65
      %p77 = scmp.eq.s32.totalorder %s22, 7
      %p78 = por %p76, %p77
      %p80 = scmp.ne.s32.totalorder %s65, %s79
      %p81 = scmp.eq.s32.totalorder %s22, 0
      %p82 = por %p80, %p81
      %s83 = ssub.s32 %s24, %s31
      %p84 = scmp.eq.s32.totalorder %s83, 0
      %s86 = sadd.s32 %s85, 1
      %s87 = scalar_select %p84, %s85, %s86
      %p90 = pneg %p84
      %p91 = scmp.eq.s32.totalorder %s16, 7
      %p92 = por %p90, %p91
      %p93 = scmp.ne.s32.totalorder %s85, %s88
      %p94 = scmp.eq.s32.totalorder %s16, 0
      %p95 = por %p93, %p94
      %p96 = scmp.ne.s32.totalorder %s85, %s88
      %p97 = scmp.eq.s32.totalorder %s21, 7
      %p98 = por %p96, %p97
      %p99 = scmp.ne.s32.totalorder %s88, %s89
      %p100 = scmp.eq.s32.totalorder %s21, 0
      %p101 = por %p99, %p100
      %p102 = scmp.ne.s32.totalorder %s88, %s89
      %p103 = scmp.eq.s32.totalorder %s22, 7
      %p104 = por %p102, %p103
      %p106 = scmp.ne.s32.totalorder %s89, %s105
      %p107 = scmp.eq.s32.totalorder %s22, 0
      %p108 = por %p106, %p107
      %s109 = ssub.s32 %s23, %s35
      %s110 = ssub.s32 %s24, %s31
      %s111 = sor.u32 %s109, %s110
      %p112 = scmp.eq.s32.totalorder %s111, 0
      %s114 = sadd.s32 %s113, 1
      %s115 = scalar_select %p112, %s113, %s114
      %p118 = pneg %p112
      %p119 = scmp.eq.s32.totalorder %s16, 7
      %p120 = por %p118, %p119
      %p121 = scmp.ne.s32.totalorder %s113, %s116
      %p122 = scmp.eq.s32.totalorder %s16, 0
      %p123 = por %p121, %p122
      %p124 = scmp.ne.s32.totalorder %s113, %s116
      %p125 = scmp.eq.s32.totalorder %s21, 7
      %p126 = por %p124, %p125
      %p127 = scmp.ne.s32.totalorder %s116, %s117
      %p128 = scmp.eq.s32.totalorder %s21, 0
      %p129 = por %p127, %p128
      %p130 = scmp.ne.s32.totalorder %s116, %s117
      %p131 = scmp.eq.s32.totalorder %s22, 7
      %p132 = por %p130, %p131
      %p134 = scmp.ne.s32.totalorder %s117, %s133
      %p135 = scmp.eq.s32.totalorder %s22, 0
      %p136 = por %p134, %p135
      %p137 = scmp.le.s32.totalorder 1, %s16
      %p138 = scmp.lt.s32.totalorder %s16, 9
      %p139 = pnand %p137, %p138
      %p140 = pneg %p139
      // Predicated region
      $region9: #{tpu_custom_call.1} parent=5 // pred_check
        _
      $region10: #{tpu_custom_call.1} parent=5 // pred_check_branch
        %142 = sbr.rel (%p139) target = $region12
      $region11: #{tpu_custom_call.1} parent=5 // pred_region
        %s143 = ssub.s32 %s16, 1
        // Predicated region
        $region13: #{tpu_custom_call.1} parent=11 // pred_check
          %p144 = pneg %p75
        $region14: #{tpu_custom_call.1} parent=11 // pred_check_branch
          %146 = sbr.rel (%p144) target = $region16
        $region15: #{tpu_custom_call.1} parent=11 // pred_region
          %s148 = ssub.s32 32, 32
          %149 = vsyncadd [#allocation8], %s148
          %s151 = sshll.u32 [#allocation7], 4
          %s152 = int_to_ptr.vmem [resolvable:$true] %s151
          %154 = dma.hbm_to_vmem [thread:$0]  %s1, 32, %s152, [#allocation8]
        $region16: #{tpu_custom_call.1} parent=11 // pred_fallthru
          _
      $region12: #{tpu_custom_call.1} parent=5 // pred_fallthru
        _
      %p155 = scmp.lt.s32.totalorder %s16, 8
      // Predicated region
      $region17: #{tpu_custom_call.1} parent=5 // pred_check
        %p156 = pneg %p155
      $region18: #{tpu_custom_call.1} parent=5 // pred_check_branch
        %158 = sbr.rel (%p156) target = $region20
      $region19: #{tpu_custom_call.1} parent=5 // pred_region
        // Predicated region
        $region21: #{tpu_custom_call.1} parent=19 // pred_check
          %p159 = pneg %p48
        $region22: #{tpu_custom_call.1} parent=19 // pred_check_branch
          %161 = sbr.rel (%p159) target = $region24
        $region23: #{tpu_custom_call.1} parent=19 // pred_region
          %s162 = sand.u32 %s16, 1
          %s163 = scalar_lea.sflag [#allocation5], %s162
          %s164 = sand.u32 %s38, 1
          %s165 = smul.addr %s164, 128
          %s166 = scalar_lea.vmem [#allocation4], %s165
          %s167 = smul.u32 8, %s23
          %s169 = ssub.s32 2048, 2048
          %170 = vsyncadd %s163, %s169
          %s171 = smul.addr %s167, 2
          %s172 = smul.addr %s171, 128
          %s173 = scalar_lea.hbm %s0, %s172
          %s174 = sshll.u32 %s166, 4
          %s175 = int_to_ptr.vmem [resolvable:$true] %s174
          %180 = dma.hbm_to_vmem [thread:$0]  %s173, 2048, %s175, %s163, 256, 256, 16
        $region24: #{tpu_custom_call.1} parent=19 // pred_fallthru
          _
        // Predicated region
        $region25: #{tpu_custom_call.1} parent=19 // pred_check
          %p181 = pneg %p95
        $region26: #{tpu_custom_call.1} parent=19 // pred_check_branch
          %183 = sbr.rel (%p181) target = $region28
        $region27: #{tpu_custom_call.1} parent=19 // pred_region
          %s184 = sand.u32 %s16, 1
          %s185 = scalar_lea.sflag [#allocation5], %s184
          %s186 = sand.u32 %s85, 1
          %s187 = smul.addr %s186, 192
          %s188 = scalar_lea.vmem [#allocation9], %s187
          %s189 = smul.u32 3, %s24
          %s191 = ssub.s32 3072, 3072
          %192 = vsyncadd %s185, %s191
          %s193 = smul.addr %s189, 128
          %s194 = scalar_lea.hbm %s2, %s193
          %s195 = sshll.u32 %s188, 4
          %s196 = int_to_ptr.vmem [resolvable:$true] %s195
          %201 = dma.hbm_to_vmem [thread:$0]  %s194, 3072, %s196, %s185, 768, 384, 24
        $region28: #{tpu_custom_call.1} parent=19 // pred_fallthru
          _
      $region20: #{tpu_custom_call.1} parent=5 // pred_fallthru
        _
      %p202 = scmp.le.s32.totalorder 1, %s16
      %p203 = scmp.lt.s32.totalorder %s16, 9
      %p204 = pnand %p202, %p203
      %p205 = pneg %p204
      // Predicated region
      $region29: #{tpu_custom_call.1} parent=5 // pred_check
        _
      $region30: #{tpu_custom_call.1} parent=5 // pred_check_branch
        %207 = sbr.rel (%p204) target = $region32
      $region31: #{tpu_custom_call.1} parent=5 // pred_region
        %s208 = ssub.s32 %s16, 1
        %s209 = sand.u32 %s21, 1
        %s210 = scalar_lea.sflag [#allocation5], %s209
        %s211 = sand.u32 %s41, 1
        %s212 = smul.addr %s211, 128
        %s213 = scalar_lea.vmem [#allocation4], %s212
        // Predicated region
        $region33: #{tpu_custom_call.1} parent=31 // pred_check
          %p214 = pneg %p54
        $region34: #{tpu_custom_call.1} parent=31 // pred_check_branch
          %216 = sbr.rel (%p214) target = $region36
        $region35: #{tpu_custom_call.1} parent=31 // pred_region
          %217 = dma.done %s210, 2048
        $region36: #{tpu_custom_call.1} parent=31 // pred_fallthru
          _
        // Predicated region
        $region37: #{tpu_custom_call.1} parent=31 // pred_check
          %p218 = pneg %p75
        $region38: #{tpu_custom_call.1} parent=31 // pred_check_branch
          %220 = sbr.rel (%p218) target = $region40
        $region39: #{tpu_custom_call.1} parent=31 // pred_region
          %221 = dma.done [#allocation8], 32
        $region40: #{tpu_custom_call.1} parent=31 // pred_fallthru
          _
        %s222 = sand.u32 %s21, 1
        %s223 = scalar_lea.sflag [#allocation5], %s222
        %s224 = sand.u32 %s88, 1
        %s225 = smul.addr %s224, 192
        %s226 = scalar_lea.vmem [#allocation9], %s225
        // Predicated region
        $region41: #{tpu_custom_call.1} parent=31 // pred_check
          %p227 = pneg %p101
        $region42: #{tpu_custom_call.1} parent=31 // pred_check_branch
          %229 = sbr.rel (%p227) target = $region44
        $region43: #{tpu_custom_call.1} parent=31 // pred_region
          %230 = dma.done %s223, 3072
        $region44: #{tpu_custom_call.1} parent=31 // pred_fallthru
          _
        %s231 = sand.u32 %s21, 1
        %s232 = scalar_lea.sflag [#allocation5], %s231
        %s233 = sand.u32 %s41, 1
        %s234 = smul.addr %s233, 128
        %s235 = scalar_lea.vmem [#allocation4], %s234
        %p236 = pneg %p54
        %p237 = pneg %p51
        %p238 = pneg %p75
        %p239 = pneg %p72
        %s240 = sand.u32 %s21, 1
        %s241 = scalar_lea.sflag [#allocation5], %s240
        %s242 = sand.u32 %s88, 1
        %s243 = smul.addr %s242, 192
        %s244 = scalar_lea.vmem [#allocation9], %s243
        %p245 = pneg %p101
        %p246 = pneg %p98
        %p247 = pneg %p129
        %p248 = pneg %p126
        %s249 = sand.u32 %s116, 1
        %s250 = scalar_lea.sflag [#allocation6], %s249
        %s251 = sand.u32 %s116, 1
        %s252 = smul.addr %s251, 192
        %s253 = scalar_lea.vmem [#allocation10], %s252
        %s254 = smul.u32 8, %s25
        %s255 = smul.u32 3, %s26
        %s256 = smul.u32 8, %s25
        %s257 = smul.u32 3, %s26
        %p259 = scmp.eq.s32.totalorder %s26, 0
        // Predicated region
        $region45: #{tpu_custom_call.1} parent=31 // pred_check
          %p260 = pneg %p259
        $region46: #{tpu_custom_call.1} parent=31 // pred_check_branch
          %262 = sbr.rel (%p260) target = $region48
        $region47: #{tpu_custom_call.1} parent=31 // pred_region
          %v263 = vld [vmem:[%s213] sm:$0xff]
          %v264 = vld [vmem:[%s213 + $0x8] sm:$0xff]
          %v265 = vld [vmem:[%s213 + $0x10] sm:$0xff]
          %v266 = vld [vmem:[%s213 + $0x18] sm:$0xff]
          %v267 = vld [vmem:[%s213 + $0x20] sm:$0xff]
          %v268 = vld [vmem:[%s213 + $0x28] sm:$0xff]
          %v269 = vld [vmem:[%s213 + $0x30] sm:$0xff]
          %v270 = vld [vmem:[%s213 + $0x38] sm:$0xff]
          %v271 = vld [vmem:[%s213 + $0x40] sm:$0xff]
          %v272 = vld [vmem:[%s213 + $0x48] sm:$0xff]
          %v273 = vld [vmem:[%s213 + $0x50] sm:$0xff]
          %v274 = vld [vmem:[%s213 + $0x58] sm:$0xff]
          %v275 = vld [vmem:[%s213 + $0x60] sm:$0xff]
          %v276 = vld [vmem:[%s213 + $0x68] sm:$0xff]
          %v277 = vld [vmem:[%s213 + $0x70] sm:$0xff]
          %v278 = vld [vmem:[%s213 + $0x78] sm:$0xff]
          %v279 = vld [vmem:[#allocation7] sm:$0x3]
          %v280 = vmul.f32 %v263, %v263
          %v281 = vmul.f32 %v264, %v264
          %v282 = vmul.f32 %v265, %v265
          %v283 = vmul.f32 %v266, %v266
          %v284 = vmul.f32 %v267, %v267
          %v285 = vmul.f32 %v268, %v268
          %v286 = vmul.f32 %v269, %v269
          %v287 = vmul.f32 %v270, %v270
          %v288 = vmul.f32 %v271, %v271
          %v289 = vmul.f32 %v272, %v272
          %v290 = vmul.f32 %v273, %v273
          %v291 = vmul.f32 %v274, %v274
          %v292 = vmul.f32 %v275, %v275
          %v293 = vmul.f32 %v276, %v276
          %v294 = vmul.f32 %v277, %v277
          %v295 = vmul.f32 %v278, %v278
          %v296 = vadd.f32 %v280, %v281
          %297 = vadd.xlane.f32.xlu0 %v296
          %v298 = vpop.xlane.xlu0 %297
          %v299 = vadd.f32 %v282, %v283
          %300 = vadd.xlane.f32.xlu0 %v299
          %v301 = vpop.xlane.xlu0 %300
          %v302 = vadd.f32 %v284, %v285
          %303 = vadd.xlane.f32.xlu0 %v302
          %v304 = vpop.xlane.xlu0 %303
          %v305 = vadd.f32 %v286, %v287
          %306 = vadd.xlane.f32.xlu0 %v305
          %v307 = vpop.xlane.xlu0 %306
          %v308 = vadd.f32 %v288, %v289
          %309 = vadd.xlane.f32.xlu0 %v308
          %v310 = vpop.xlane.xlu0 %309
          %v311 = vadd.f32 %v290, %v291
          %312 = vadd.xlane.f32.xlu0 %v311
          %v313 = vpop.xlane.xlu0 %312
          %v314 = vadd.f32 %v292, %v293
          %315 = vadd.xlane.f32.xlu0 %v314
          %v316 = vpop.xlane.xlu0 %315
          %v317 = vadd.f32 %v294, %v295
          %318 = vadd.xlane.f32.xlu0 %v317
          %v319 = vpop.xlane.xlu0 %318
          %v320 = vrcp.pop 256.0
          %v321 = vmul.f32 %v298, %v320
          %v322 = vmul.f32 %v301, %v320
          %v323 = vmul.f32 %v304, %v320
          %v324 = vmul.f32 %v307, %v320
          %v325 = vmul.f32 %v310, %v320
          %v326 = vmul.f32 %v313, %v320
          %v327 = vmul.f32 %v316, %v320
          %v328 = vmul.f32 %v319, %v320
          %v329 = vadd.f32 %v321, 1e-06
          %v330 = vadd.f32 %v322, 1e-06
          %v331 = vadd.f32 %v323, 1e-06
          %v332 = vadd.f32 %v324, 1e-06
          %v333 = vadd.f32 %v325, 1e-06
          %v334 = vadd.f32 %v326, 1e-06
          %v335 = vadd.f32 %v327, 1e-06
          %v336 = vadd.f32 %v328, 1e-06
          %v337 = vrsqrt.pop %v329
          %v338 = vrsqrt.pop %v330
          %v339 = vrsqrt.pop %v331
          %v340 = vrsqrt.pop %v332
          %v341 = vrsqrt.pop %v333
          %v342 = vrsqrt.pop %v334
          %v343 = vrsqrt.pop %v335
          %v344 = vrsqrt.pop %v336
          %v345 = vmul.f32 %v263, %v337
          %v346 = vmul.f32 %v264, %v337
          %v347 = vmul.f32 %v265, %v338
          %v348 = vmul.f32 %v266, %v338
          %v349 = vmul.f32 %v267, %v339
          %v350 = vmul.f32 %v268, %v339
          %v351 = vmul.f32 %v269, %v340
          %v352 = vmul.f32 %v270, %v340
          %v353 = vmul.f32 %v271, %v341
          %v354 = vmul.f32 %v272, %v341
          %v355 = vmul.f32 %v273, %v342
          %v356 = vmul.f32 %v274, %v342
          %v357 = vmul.f32 %v275, %v343
          %v358 = vmul.f32 %v276, %v343
          %v359 = vmul.f32 %v277, %v344
          %v360 = vmul.f32 %v278, %v344
          %v362 = vlaneseq
          %v363 = vshrl.u32 %v362, 7
          %v364 = vsub.s32 0, %v363
          %v365 = vrot.slane %v279, %v364
          %v366 = vlaneseq
          %v367 = vshrl.u32 %v366, 7
          %v368 = vsub.s32 1, %v367
          %v369 = vrot.slane %v279, %v368
          %v372 = vmul.f32 %v345, %v365
          %v373 = vmul.f32 %v346, %v369
          %v374 = vmul.f32 %v347, %v365
          %v375 = vmul.f32 %v348, %v369
          %v376 = vmul.f32 %v349, %v365
          %v377 = vmul.f32 %v350, %v369
          %v378 = vmul.f32 %v351, %v365
          %v379 = vmul.f32 %v352, %v369
          %v380 = vmul.f32 %v353, %v365
          %v381 = vmul.f32 %v354, %v369
          %v382 = vmul.f32 %v355, %v365
          %v383 = vmul.f32 %v356, %v369
          %v384 = vmul.f32 %v357, %v365
          %v385 = vmul.f32 %v358, %v369
          %v386 = vmul.f32 %v359, %v365
          %v387 = vmul.f32 %v360, %v369
          %v388 = vand.u32 2147483647, %v372
          %v389 = vand.u32 2147483647, %v373
          %v390 = vand.u32 2147483647, %v374
          %v391 = vand.u32 2147483647, %v375
          %v392 = vand.u32 2147483647, %v376
          %v393 = vand.u32 2147483647, %v377
          %v394 = vand.u32 2147483647, %v378
          %v395 = vand.u32 2147483647, %v379
          %v396 = vand.u32 2147483647, %v380
          %v397 = vand.u32 2147483647, %v381
          %v398 = vand.u32 2147483647, %v382
          %v399 = vand.u32 2147483647, %v383
          %v400 = vand.u32 2147483647, %v384
          %v401 = vand.u32 2147483647, %v385
          %v402 = vand.u32 2147483647, %v386
          %v403 = vand.u32 2147483647, %v387
          %v404 = vmax.f32 %v388, %v389
          %405 = vmax.xlane.f32.xlu0 %v404
          %v406 = vpop.xlane.xlu0 %405
          %v407 = vmax.f32 %v390, %v391
          %408 = vmax.xlane.f32.xlu0 %v407
          %v409 = vpop.xlane.xlu0 %408
          %v410 = vmax.f32 %v392, %v393
          %411 = vmax.xlane.f32.xlu0 %v410
          %v412 = vpop.xlane.xlu0 %411
          %v413 = vmax.f32 %v394, %v395
          %414 = vmax.xlane.f32.xlu0 %v413
          %v415 = vpop.xlane.xlu0 %414
          %v416 = vmax.f32 %v396, %v397
          %417 = vmax.xlane.f32.xlu0 %v416
          %v418 = vpop.xlane.xlu0 %417
          %v419 = vmax.f32 %v398, %v399
          %420 = vmax.xlane.f32.xlu0 %v419
          %v421 = vpop.xlane.xlu0 %420
          %v422 = vmax.f32 %v400, %v401
          %423 = vmax.xlane.f32.xlu0 %v422
          %v424 = vpop.xlane.xlu0 %423
          %v425 = vmax.f32 %v402, %v403
          %426 = vmax.xlane.f32.xlu0 %v425
          %v427 = vpop.xlane.xlu0 %426
          %v428 = vmax.f32 %v406, 1e-05
          %v429 = vmax.f32 %v409, 1e-05
          %v430 = vmax.f32 %v412, 1e-05
          %v431 = vmax.f32 %v415, 1e-05
          %v432 = vmax.f32 %v418, 1e-05
          %v433 = vmax.f32 %v421, 1e-05
          %v434 = vmax.f32 %v424, 1e-05
          %v435 = vmax.f32 %v427, 1e-05
          %v436 = vrcp.pop %v428
          %v437 = vmul.f32 127.0, %v436
          %v438 = vrcp.pop %v429
          %v439 = vmul.f32 127.0, %v438
          %v440 = vrcp.pop %v430
          %v441 = vmul.f32 127.0, %v440
          %v442 = vrcp.pop %v431
          %v443 = vmul.f32 127.0, %v442
          %v444 = vrcp.pop %v432
          %v445 = vmul.f32 127.0, %v444
          %v446 = vrcp.pop %v433
          %v447 = vmul.f32 127.0, %v446
          %v448 = vrcp.pop %v434
          %v449 = vmul.f32 127.0, %v448
          %v450 = vrcp.pop %v435
          %v451 = vmul.f32 127.0, %v450
          %v452 = vmul.f32 %v372, %v437
          %v453 = vmul.f32 %v373, %v437
          %v454 = vmul.f32 %v374, %v439
          %v455 = vmul.f32 %v375, %v439
          %v456 = vmul.f32 %v376, %v441
          %v457 = vmul.f32 %v377, %v441
          %v458 = vmul.f32 %v378, %v443
          %v459 = vmul.f32 %v379, %v443
          %v460 = vmul.f32 %v380, %v445
          %v461 = vmul.f32 %v381, %v445
          %v462 = vmul.f32 %v382, %v447
          %v463 = vmul.f32 %v383, %v447
          %v464 = vmul.f32 %v384, %v449
          %v465 = vmul.f32 %v385, %v449
          %v466 = vmul.f32 %v386, %v451
          %v467 = vmul.f32 %v387, %v451
          %v468 = vround.ne.pseudo %v452
          %v469 = vround.ne.pseudo %v453
          %v470 = vround.ne.pseudo %v454
          %v471 = vround.ne.pseudo %v455
          %v472 = vround.ne.pseudo %v456
          %v473 = vround.ne.pseudo %v457
          %v474 = vround.ne.pseudo %v458
          %v475 = vround.ne.pseudo %v459
          %v476 = vround.ne.pseudo %v460
          %v477 = vround.ne.pseudo %v461
          %v478 = vround.ne.pseudo %v462
          %v479 = vround.ne.pseudo %v463
          %v480 = vround.ne.pseudo %v464
          %v481 = vround.ne.pseudo %v465
          %v482 = vround.ne.pseudo %v466
          %v483 = vround.ne.pseudo %v467
          %v484 = vmax.f32 %v468, -128.0
          %v485 = vmax.f32 %v469, -128.0
          %v486 = vmax.f32 %v470, -128.0
          %v487 = vmax.f32 %v471, -128.0
          %v488 = vmax.f32 %v472, -128.0
          %v489 = vmax.f32 %v473, -128.0
          %v490 = vmax.f32 %v474, -128.0
          %v491 = vmax.f32 %v475, -128.0
          %v492 = vmax.f32 %v476, -128.0
          %v493 = vmax.f32 %v477, -128.0
          %v494 = vmax.f32 %v478, -128.0
          %v495 = vmax.f32 %v479, -128.0
          %v496 = vmax.f32 %v480, -128.0
          %v497 = vmax.f32 %v481, -128.0
          %v498 = vmax.f32 %v482, -128.0
          %v499 = vmax.f32 %v483, -128.0
          %v500 = vmin.f32 %v484, 127.0
          %v501 = vmin.f32 %v485, 127.0
          %v502 = vmin.f32 %v486, 127.0
          %v503 = vmin.f32 %v487, 127.0
          %v504 = vmin.f32 %v488, 127.0
          %v505 = vmin.f32 %v489, 127.0
          %v506 = vmin.f32 %v490, 127.0
          %v507 = vmin.f32 %v491, 127.0
          %v508 = vmin.f32 %v492, 127.0
          %v509 = vmin.f32 %v493, 127.0
          %v510 = vmin.f32 %v494, 127.0
          %v511 = vmin.f32 %v495, 127.0
          %v512 = vmin.f32 %v496, 127.0
          %v513 = vmin.f32 %v497, 127.0
          %v514 = vmin.f32 %v498, 127.0
          %v515 = vmin.f32 %v499, 127.0
          %v516 = vpack.c.bf16 %v502, %v500
          %v517 = vpack.c.bf16 %v503, %v501
          %v518 = vpack.c.bf16 %v506, %v504
          %v519 = vpack.c.bf16 %v507, %v505
          %v520 = vpack.c.bf16 %v510, %v508
          %v521 = vpack.c.bf16 %v511, %v509
          %v522 = vpack.c.bf16 %v514, %v512
          %v523 = vpack.c.bf16 %v515, %v513
          %v532 = vunpack.c.l.b16 %v516
          %v533 = vunpack.c.l.b16 %v517
          %v534 = vunpack.c.h.b16 %v516
          %v535 = vunpack.c.h.b16 %v517
          %v536 = vunpack.c.l.b16 %v518
          %v537 = vunpack.c.l.b16 %v519
          %v538 = vunpack.c.h.b16 %v518
          %v539 = vunpack.c.h.b16 %v519
          %v540 = vunpack.c.l.b16 %v520
          %v541 = vunpack.c.l.b16 %v521
          %v542 = vunpack.c.h.b16 %v520
          %v543 = vunpack.c.h.b16 %v521
          %v544 = vunpack.c.l.b16 %v522
          %v545 = vunpack.c.l.b16 %v523
          %v546 = vunpack.c.h.b16 %v522
          %v547 = vunpack.c.h.b16 %v523
          %v548 = vpack.c.b16 %v533, %v532
          %v549 = vpack.c.b16 %v535, %v534
          %v550 = vpack.c.b16 %v537, %v536
          %v551 = vpack.c.b16 %v539, %v538
          %v552 = vpack.c.b16 %v541, %v540
          %v553 = vpack.c.b16 %v543, %v542
          %v554 = vpack.c.b16 %v545, %v544
          %v555 = vpack.c.b16 %v547, %v546
          %564 = vst [vmem:[#allocation2] sm:$0xff] %v548
          %565 = vst [vmem:[#allocation2 + $0x8] sm:$0xff] %v549
          %566 = vst [vmem:[#allocation2 + $0x10] sm:$0xff] %v550
          %567 = vst [vmem:[#allocation2 + $0x18] sm:$0xff] %v551
          %568 = vst [vmem:[#allocation2 + $0x20] sm:$0xff] %v552
          %569 = vst [vmem:[#allocation2 + $0x28] sm:$0xff] %v553
          %570 = vst [vmem:[#allocation2 + $0x30] sm:$0xff] %v554
          %571 = vst [vmem:[#allocation2 + $0x38] sm:$0xff] %v555
          %v572 = vmul.f32 %v428, 0.007874016
          %v573 = vmul.f32 %v429, 0.007874016
          %v574 = vmul.f32 %v430, 0.007874016
          %v575 = vmul.f32 %v431, 0.007874016
          %v576 = vmul.f32 %v432, 0.007874016
          %v577 = vmul.f32 %v433, 0.007874016
          %v578 = vmul.f32 %v434, 0.007874016
          %v579 = vmul.f32 %v435, 0.007874016
          %vm580 = vcmask 7168
          %581 = vst.msk [vmem:[#allocation3] sm:$0xff] %vm580, %v572
          %582 = vst.msk [vmem:[#allocation3 + $0x8] sm:$0xff] %vm580, %v573
          %583 = vst.msk [vmem:[#allocation3 + $0x10] sm:$0xff] %vm580, %v574
          %584 = vst.msk [vmem:[#allocation3 + $0x18] sm:$0xff] %vm580, %v575
          %585 = vst.msk [vmem:[#allocation3 + $0x20] sm:$0xff] %vm580, %v576
          %586 = vst.msk [vmem:[#allocation3 + $0x28] sm:$0xff] %vm580, %v577
          %587 = vst.msk [vmem:[#allocation3 + $0x30] sm:$0xff] %vm580, %v578
          %588 = vst.msk [vmem:[#allocation3 + $0x38] sm:$0xff] %vm580, %v579
        $region48: #{tpu_custom_call.1} parent=31 // pred_fallthru
          _
        %v589 = vld [vmem:[#allocation2] sm:$0xff]
        %v590 = vld [vmem:[#allocation2 + $0x8] sm:$0xff]
        %v591 = vld [vmem:[#allocation2 + $0x10] sm:$0xff]
        %v592 = vld [vmem:[#allocation2 + $0x18] sm:$0xff]
        %v593 = vld [vmem:[#allocation2 + $0x20] sm:$0xff]
        %v594 = vld [vmem:[#allocation2 + $0x28] sm:$0xff]
        %v595 = vld [vmem:[#allocation2 + $0x30] sm:$0xff]
        %v596 = vld [vmem:[#allocation2 + $0x38] sm:$0xff]
        %v597 = vld [vmem:[%s226] sm:$0xff]
        %v598 = vld [vmem:[%s226 + $0x8] sm:$0xff]
        %v599 = vld [vmem:[%s226 + $0x10] sm:$0xff]
        %v600 = vld [vmem:[%s226 + $0x18] sm:$0xff]
        %v601 = vld [vmem:[%s226 + $0x20] sm:$0xff]
        %v602 = vld [vmem:[%s226 + $0x28] sm:$0xff]
        %v603 = vld [vmem:[%s226 + $0x30] sm:$0xff]
        %v604 = vld [vmem:[%s226 + $0x38] sm:$0xff]
        %v605 = vld [vmem:[%s226 + $0x40] sm:$0xff]
        %v606 = vld [vmem:[%s226 + $0x48] sm:$0xff]
        %v607 = vld [vmem:[%s226 + $0x50] sm:$0xff]
        %v608 = vld [vmem:[%s226 + $0x58] sm:$0xff]
        %v609 = vld [vmem:[%s226 + $0x60] sm:$0xff]
        %v610 = vld [vmem:[%s226 + $0x68] sm:$0xff]
        %v611 = vld [vmem:[%s226 + $0x70] sm:$0xff]
        %v612 = vld [vmem:[%s226 + $0x78] sm:$0xff]
        %v613 = vld [vmem:[%s226 + $0x80] sm:$0xff]
        %v614 = vld [vmem:[%s226 + $0x88] sm:$0xff]
        %v615 = vld [vmem:[%s226 + $0x90] sm:$0xff]
        %v616 = vld [vmem:[%s226 + $0x98] sm:$0xff]
        %v617 = vld [vmem:[%s226 + $0xa0] sm:$0xff]
        %v618 = vld [vmem:[%s226 + $0xa8] sm:$0xff]
        %v619 = vld [vmem:[%s226 + $0xb0] sm:$0xff]
        %v620 = vld [vmem:[%s226 + $0xb8] sm:$0xff]
        %v621 = vunpack.c.l.s8.bf16 %v597
        %v622 = vunpack.c.l.s8.bf16 %v598
        %v623 = vunpack.c.l.s8.bf16 %v599
        %v624 = vunpack.c.h.s8.bf16 %v597
        %v625 = vunpack.c.h.s8.bf16 %v598
        %v626 = vunpack.c.h.s8.bf16 %v599
        %v627 = vunpack.c.l.s8.bf16 %v600
        %v628 = vunpack.c.l.s8.bf16 %v601
        %v629 = vunpack.c.l.s8.bf16 %v602
        %v630 = vunpack.c.h.s8.bf16 %v600
        %v631 = vunpack.c.h.s8.bf16 %v601
        %v632 = vunpack.c.h.s8.bf16 %v602
        %v633 = vunpack.c.l.s8.bf16 %v603
        %v634 = vunpack.c.l.s8.bf16 %v604
        %v635 = vunpack.c.l.s8.bf16 %v605
        %v636 = vunpack.c.h.s8.bf16 %v603
        %v637 = vunpack.c.h.s8.bf16 %v604
        %v638 = vunpack.c.h.s8.bf16 %v605
        %v639 = vunpack.c.l.s8.bf16 %v606
        %v640 = vunpack.c.l.s8.bf16 %v607
        %v641 = vunpack.c.l.s8.bf16 %v608
        %v642 = vunpack.c.h.s8.bf16 %v606
        %v643 = vunpack.c.h.s8.bf16 %v607
        %v644 = vunpack.c.h.s8.bf16 %v608
        %v645 = vunpack.c.l.s8.bf16 %v609
        %v646 = vunpack.c.l.s8.bf16 %v610
        %v647 = vunpack.c.l.s8.bf16 %v611
        %v648 = vunpack.c.h.s8.bf16 %v609
        %v649 = vunpack.c.h.s8.bf16 %v610
        %v650 = vunpack.c.h.s8.bf16 %v611
        %v651 = vunpack.c.l.s8.bf16 %v612
        %v652 = vunpack.c.l.s8.bf16 %v613
        %v653 = vunpack.c.l.s8.bf16 %v614
        %v654 = vunpack.c.h.s8.bf16 %v612
        %v655 = vunpack.c.h.s8.bf16 %v613
        %v656 = vunpack.c.h.s8.bf16 %v614
        %v657 = vunpack.c.l.s8.bf16 %v615
        %v658 = vunpack.c.l.s8.bf16 %v616
        %v659 = vunpack.c.l.s8.bf16 %v617
        %v660 = vunpack.c.h.s8.bf16 %v615
        %v661 = vunpack.c.h.s8.bf16 %v616
        %v662 = vunpack.c.h.s8.bf16 %v617
        %v663 = vunpack.c.l.s8.bf16 %v618
        %v664 = vunpack.c.l.s8.bf16 %v619
        %v665 = vunpack.c.l.s8.bf16 %v620
        %v666 = vunpack.c.h.s8.bf16 %v618
        %v667 = vunpack.c.h.s8.bf16 %v619
        %v668 = vunpack.c.h.s8.bf16 %v620
        %v677 = vunpack.c.l.b16 %v589
        %v678 = vunpack.c.h.b16 %v589
        %v679 = vunpack.c.l.b16 %v590
        %v680 = vunpack.c.h.b16 %v590
        %v681 = vunpack.c.l.b16 %v591
        %v682 = vunpack.c.h.b16 %v591
        %v683 = vunpack.c.l.b16 %v592
        %v684 = vunpack.c.h.b16 %v592
        %v685 = vunpack.c.l.b16 %v593
        %v686 = vunpack.c.h.b16 %v593
        %v687 = vunpack.c.l.b16 %v594
        %v688 = vunpack.c.h.b16 %v594
        %v689 = vunpack.c.l.b16 %v595
        %v690 = vunpack.c.h.b16 %v595
        %v691 = vunpack.c.l.b16 %v596
        %v692 = vunpack.c.h.b16 %v596
        %v693 = vpack.c.b16 %v679, %v677
        %v694 = vpack.c.b16 %v680, %v678
        %v695 = vpack.c.b16 %v683, %v681
        %v696 = vpack.c.b16 %v684, %v682
        %v697 = vpack.c.b16 %v687, %v685
        %v698 = vpack.c.b16 %v688, %v686
        %v699 = vpack.c.b16 %v691, %v689
        %v700 = vpack.c.b16 %v692, %v690
        %709 = vmatprep.subr.bf16.mxu0 %v643
        %710 = vmatpush1.bf16.msra.mxu0 %v642
        %711 = vmatprep.subr.bf16.mxu0 %v640
        %712 = vmatpush1.bf16.msra.mxu0 %v639
        %713 = vmatprep.subr.bf16.mxu0 %v637
        %714 = vmatpush1.bf16.msra.mxu0 %v636
        %715 = vmatprep.subr.bf16.mxu0 %v634
        %716 = vmatpush1.bf16.msra.mxu0 %v633
        %717 = vmatprep.subr.bf16.mxu0 %v631
        %718 = vmatpush1.bf16.msra.mxu0 %v630
        %719 = vmatprep.subr.bf16.mxu0 %v628
        %720 = vmatpush1.bf16.msra.mxu0 %v627
        %721 = vmatprep.subr.bf16.mxu0 %v625
        %722 = vmatpush1.bf16.msra.mxu0 %v624
        %723 = vmatprep.subr.bf16.mxu0 %v622
        %724 = vmatpush1.bf16.msra.mxu0 %v621
        %725 = vmatprep.subr.bf16.mxu0 %v667
        %726 = vmatpush2.bf16.msra.mxu0 %v666
        %727 = vmatprep.subr.bf16.mxu0 %v664
        %728 = vmatpush2.bf16.msra.mxu0 %v663
        %729 = vmatprep.subr.bf16.mxu0 %v661
        %730 = vmatpush2.bf16.msra.mxu0 %v660
        %731 = vmatprep.subr.bf16.mxu0 %v658
        %732 = vmatpush2.bf16.msra.mxu0 %v657
        %733 = vmatprep.subr.bf16.mxu0 %v655
        %734 = vmatpush2.bf16.msra.mxu0 %v654
        %735 = vmatprep.subr.bf16.mxu0 %v652
        %736 = vmatpush2.bf16.msra.mxu0 %v651
        %737 = vmatprep.subr.bf16.mxu0 %v649
        %738 = vmatpush2.bf16.msra.mxu0 %v648
        %739 = vmatprep.subr.bf16.mxu0 %v646
        %740 = vmatpush2.bf16.msra.mxu0 %v645
        %741 = vmatprep.mubr.bf16.mxu0 %v694
        %742 = vmatmul.mubr.bf16.gmra.mxu0 %v693
        %v743 = vpop.f32.mrf.mxu0
        %v744 = vadd.f32 0.0, %v743
        %v745 = vpop.f32.mrf.mxu0
        %v746 = vadd.f32 0.0, %v745
        %v747 = vpop.f32.mrf.mxu0
        %v748 = vadd.f32 0.0, %v747
        %v749 = vpop.f32.mrf.mxu0
        %v750 = vadd.f32 0.0, %v749
        %751 = vmatprep.mubr.bf16.mxu0 %v696
        %752 = vmatmul.mubr.bf16.gmra.mxu0 %v695
        %v753 = vpop.f32.mrf.mxu0
        %v754 = vadd.f32 0.0, %v753
        %v755 = vpop.f32.mrf.mxu0
        %v756 = vadd.f32 0.0, %v755
        %v757 = vpop.f32.mrf.mxu0
        %v758 = vadd.f32 0.0, %v757
        %v759 = vpop.f32.mrf.mxu0
        %v760 = vadd.f32 0.0, %v759
        %761 = vmatprep.mubr.bf16.mxu0 %v698
        %762 = vmatmul.mubr.bf16.gmra.mxu0 %v697
        %v763 = vpop.f32.mrf.mxu0
        %v764 = vadd.f32 0.0, %v763
        %v765 = vpop.f32.mrf.mxu0
        %v766 = vadd.f32 0.0, %v765
        %v767 = vpop.f32.mrf.mxu0
        %v768 = vadd.f32 0.0, %v767
        %v769 = vpop.f32.mrf.mxu0
        %v770 = vadd.f32 0.0, %v769
        %771 = vmatprep.mubr.bf16.mxu0 %v700
        %772 = vmatmul.mubr.bf16.gmra.mxu0 %v699
        %v773 = vpop.f32.mrf.mxu0
        %v774 = vadd.f32 0.0, %v773
        %v775 = vpop.f32.mrf.mxu0
        %v776 = vadd.f32 0.0, %v775
        %v777 = vpop.f32.mrf.mxu0
        %v778 = vadd.f32 0.0, %v777
        %v779 = vpop.f32.mrf.mxu0
        %v780 = vadd.f32 0.0, %v779
        %781 = vdwg.mxu0
        %782 = vmatprep.subr.bf16.mxu0 0
        %783 = vmatpush1.bf16.msra.mxu0 %v644
        %784 = vmatprep.subr.bf16.mxu0 0
        %785 = vmatpush1.bf16.msra.mxu0 %v641
        %786 = vmatprep.subr.bf16.mxu0 0
        %787 = vmatpush1.bf16.msra.mxu0 %v638
        %788 = vmatprep.subr.bf16.mxu0 0
        %789 = vmatpush1.bf16.msra.mxu0 %v635
        %790 = vmatprep.subr.bf16.mxu0 0
        %791 = vmatpush1.bf16.msra.mxu0 %v632
        %792 = vmatprep.subr.bf16.mxu0 0
        %793 = vmatpush1.bf16.msra.mxu0 %v629
        %794 = vmatprep.subr.bf16.mxu0 0
        %795 = vmatpush1.bf16.msra.mxu0 %v626
        %796 = vmatprep.subr.bf16.mxu0 0
        %797 = vmatpush1.bf16.msra.mxu0 %v623
        %798 = vmatprep.subr.bf16.mxu0 0
        %799 = vmatpush2.bf16.msra.mxu0 %v668
        %800 = vmatprep.subr.bf16.mxu0 0
        %801 = vmatpush2.bf16.msra.mxu0 %v665
        %802 = vmatprep.subr.bf16.mxu0 0
        %803 = vmatpush2.bf16.msra.mxu0 %v662
        %804 = vmatprep.subr.bf16.mxu0 0
        %805 = vmatpush2.bf16.msra.mxu0 %v659
        %806 = vmatprep.subr.bf16.mxu0 0
        %807 = vmatpush2.bf16.msra.mxu0 %v656
        %808 = vmatprep.subr.bf16.mxu0 0
        %809 = vmatpush2.bf16.msra.mxu0 %v653
        %810 = vmatprep.subr.bf16.mxu0 0
        %811 = vmatpush2.bf16.msra.mxu0 %v650
        %812 = vmatprep.subr.bf16.mxu0 0
        %813 = vmatpush2.bf16.msra.mxu0 %v647
        %814 = vmatprep.mubr.bf16.mxu0 %v694
        %815 = vmatmul.mubr.bf16.gmra.mxu0 %v693
        %v816 = vpop.f32.mrf.mxu0
        %v817 = vadd.f32 0.0, %v816
        %v818 = vpop.f32.mrf.mxu0
        %v819 = vpop.f32.mrf.mxu0
        %v820 = vadd.f32 0.0, %v819
        %v821 = vpop.f32.mrf.mxu0
        %822 = vmatprep.mubr.bf16.mxu0 %v696
        %823 = vmatmul.mubr.bf16.gmra.mxu0 %v695
        %v824 = vpop.f32.mrf.mxu0
        %v825 = vadd.f32 0.0, %v824
        %v826 = vpop.f32.mrf.mxu0
        %v827 = vpop.f32.mrf.mxu0
        %v828 = vadd.f32 0.0, %v827
        %v829 = vpop.f32.mrf.mxu0
        %830 = vmatprep.mubr.bf16.mxu0 %v698
        %831 = vmatmul.mubr.bf16.gmra.mxu0 %v697
        %v832 = vpop.f32.mrf.mxu0
        %v833 = vadd.f32 0.0, %v832
        %v834 = vpop.f32.mrf.mxu0
        %v835 = vpop.f32.mrf.mxu0
        %v836 = vadd.f32 0.0, %v835
        %v837 = vpop.f32.mrf.mxu0
        %838 = vmatprep.mubr.bf16.mxu0 %v700
        %839 = vmatmul.mubr.bf16.gmra.mxu0 %v699
        %v840 = vpop.f32.mrf.mxu0
        %v841 = vadd.f32 0.0, %v840
        %v842 = vpop.f32.mrf.mxu0
        %v843 = vpop.f32.mrf.mxu0
        %v844 = vadd.f32 0.0, %v843
        %v845 = vpop.f32.mrf.mxu0
        %846 = vdwg.mxu0
        %v847 = vld [vmem:[#allocation3] sm:$0xff]
        %v848 = vld [vmem:[#allocation3 + $0x8] sm:$0xff]
        %v849 = vld [vmem:[#allocation3 + $0x10] sm:$0xff]
        %v850 = vld [vmem:[#allocation3 + $0x18] sm:$0xff]
        %v851 = vld [vmem:[#allocation3 + $0x20] sm:$0xff]
        %v852 = vld [vmem:[#allocation3 + $0x28] sm:$0xff]
        %v853 = vld [vmem:[#allocation3 + $0x30] sm:$0xff]
        %v854 = vld [vmem:[#allocation3 + $0x38] sm:$0xff]
        %856 = vset.pattern.permute.xlu0 0
        %857 = vperm.xlu0 %856, %v847
        %v858 = vpop.permute.xlu0 %857
        %861 = vset.pattern.permute.xlu0 0
        %862 = vperm.xlu0 %861, %v848
        %v863 = vpop.permute.xlu0 %862
        %866 = vset.pattern.permute.xlu0 0
        %867 = vperm.xlu0 %866, %v849
        %v868 = vpop.permute.xlu0 %867
        %871 = vset.pattern.permute.xlu0 0
        %872 = vperm.xlu0 %871, %v850
        %v873 = vpop.permute.xlu0 %872
        %876 = vset.pattern.permute.xlu0 0
        %877 = vperm.xlu0 %876, %v851
        %v878 = vpop.permute.xlu0 %877
        %881 = vset.pattern.permute.xlu0 0
        %882 = vperm.xlu0 %881, %v852
        %v883 = vpop.permute.xlu0 %882
        %886 = vset.pattern.permute.xlu0 0
        %887 = vperm.xlu0 %886, %v853
        %v888 = vpop.permute.xlu0 %887
        %891 = vset.pattern.permute.xlu0 0
        %892 = vperm.xlu0 %891, %v854
        %v893 = vpop.permute.xlu0 %892
        %v895 = vmul.f32 %v744, %v858
        %v896 = vmul.f32 %v746, %v858
        %v897 = vmul.f32 %v817, %v858
        %v898 = vmul.f32 %v748, %v863
        %v899 = vmul.f32 %v750, %v863
        %v900 = vmul.f32 %v820, %v863
        %v901 = vmul.f32 %v754, %v868
        %v902 = vmul.f32 %v756, %v868
        %v903 = vmul.f32 %v825, %v868
        %v904 = vmul.f32 %v758, %v873
        %v905 = vmul.f32 %v760, %v873
        %v906 = vmul.f32 %v828, %v873
        %v907 = vmul.f32 %v764, %v878
        %v908 = vmul.f32 %v766, %v878
        %v909 = vmul.f32 %v833, %v878
        %v910 = vmul.f32 %v768, %v883
        %v911 = vmul.f32 %v770, %v883
        %v912 = vmul.f32 %v836, %v883
        %v913 = vmul.f32 %v774, %v888
        %v914 = vmul.f32 %v776, %v888
        %v915 = vmul.f32 %v841, %v888
        %v916 = vmul.f32 %v778, %v893
        %v917 = vmul.f32 %v780, %v893
        %v918 = vmul.f32 %v844, %v893
        %919 = vst [vmem:[%s253] sm:$0xff] %v895
        %920 = vst [vmem:[%s253 + $0x8] sm:$0xff] %v896
        %921 = vst [vmem:[%s253 + $0x10] sm:$0xff] %v897
        %922 = vst [vmem:[%s253 + $0x18] sm:$0xff] %v898
        %923 = vst [vmem:[%s253 + $0x20] sm:$0xff] %v899
        %924 = vst [vmem:[%s253 + $0x28] sm:$0xff] %v900
        %925 = vst [vmem:[%s253 + $0x30] sm:$0xff] %v901
        %926 = vst [vmem:[%s253 + $0x38] sm:$0xff] %v902
        %927 = vst [vmem:[%s253 + $0x40] sm:$0xff] %v903
        %928 = vst [vmem:[%s253 + $0x48] sm:$0xff] %v904
        %929 = vst [vmem:[%s253 + $0x50] sm:$0xff] %v905
        %930 = vst [vmem:[%s253 + $0x58] sm:$0xff] %v906
        %931 = vst [vmem:[%s253 + $0x60] sm:$0xff] %v907
        %932 = vst [vmem:[%s253 + $0x68] sm:$0xff] %v908
        %933 = vst [vmem:[%s253 + $0x70] sm:$0xff] %v909
        %934 = vst [vmem:[%s253 + $0x78] sm:$0xff] %v910
        %935 = vst [vmem:[%s253 + $0x80] sm:$0xff] %v911
        %936 = vst [vmem:[%s253 + $0x88] sm:$0xff] %v912
        %937 = vst [vmem:[%s253 + $0x90] sm:$0xff] %v913
        %938 = vst [vmem:[%s253 + $0x98] sm:$0xff] %v914
        %939 = vst [vmem:[%s253 + $0xa0] sm:$0xff] %v915
        %940 = vst [vmem:[%s253 + $0xa8] sm:$0xff] %v916
        %941 = vst [vmem:[%s253 + $0xb0] sm:$0xff] %v917
        %942 = vst [vmem:[%s253 + $0xb8] sm:$0xff] %v918
        %s943 = sand.u32 %s116, 1
        %s944 = scalar_lea.sflag [#allocation6], %s943
        %s945 = sand.u32 %s116, 1
        %s946 = smul.addr %s945, 192
        %s947 = scalar_lea.vmem [#allocation10], %s946
        // Predicated region
        $region49: #{tpu_custom_call.1} parent=31 // pred_check
          %p948 = pneg %p126
        $region50: #{tpu_custom_call.1} parent=31 // pred_check_branch
          %950 = sbr.rel (%p948) target = $region52
        $region51: #{tpu_custom_call.1} parent=31 // pred_region
          %s951 = smul.u32 8, %s25
          %s952 = smul.u32 3, %s26
          %s954 = ssub.s32 3072, 3072
          %955 = vsyncadd %s944, %s954
          %s956 = smul.addr %s951, 6
          %s957 = sadd.s32 %s952, %s956
          %s958 = smul.addr %s957, 128
          %s959 = scalar_lea.hbm %s3, %s958
          %s960 = sshll.u32 %s947, 4
          %s961 = int_to_ptr.vmem [resolvable:$true] %s960
          %966 = dma.vmem_to_hbm [thread:$0]  %s961, 3072, %s959, %s944, 384, 768, 24
        $region52: #{tpu_custom_call.1} parent=31 // pred_fallthru
          _
      $region32: #{tpu_custom_call.1} parent=5 // pred_fallthru
        _
      %p967 = scmp.le.s32.totalorder 2, %s16
      // Predicated region
      $region53: #{tpu_custom_call.1} parent=5 // pred_check
        %p968 = pneg %p967
      $region54: #{tpu_custom_call.1} parent=5 // pred_check_branch
        %970 = sbr.rel (%p968) target = $region56
      $region55: #{tpu_custom_call.1} parent=5 // pred_region
        %s971 = ssub.s32 %s16, 2
        // Predicated region
        $region57: #{tpu_custom_call.1} parent=55 // pred_check
          %p972 = pneg %p132
        $region58: #{tpu_custom_call.1} parent=55 // pred_check_branch
          %974 = sbr.rel (%p972) target = $region60
        $region59: #{tpu_custom_call.1} parent=55 // pred_region
          %s975 = sand.u32 %s117, 1
          %s976 = scalar_lea.sflag [#allocation6], %s975
          %s977 = sand.u32 %s117, 1
          %s978 = smul.addr %s977, 192
          %s979 = scalar_lea.vmem [#allocation10], %s978
          %980 = dma.done %s976, 3072
        $region60: #{tpu_custom_call.1} parent=55 // pred_fallthru
          _
      $region56: #{tpu_custom_call.1} parent=5 // pred_fallthru
        _
    $region6: #{tpu_custom_call.1} parent=1 // loop_footer
      %s20 = sadd.s32 1, %s16
    $region7: #{tpu_custom_call.1} parent=1 // loop_footer_branch
      %15 = sbr.rel target = $region3
    $region8: #{tpu_custom_call.1} parent=1 // loop_exit
      _
    %981 = vsyncpa [#allocation5], 1
    %s982 = scalar_lea.sflag [#allocation5], 1
    %983 = vsyncpa %s982, 1
    %984 = vsyncpa [#allocation8], 1
    %985 = vsyncpa [#allocation6], 1
    %s986 = scalar_lea.sflag [#allocation6], 1
    %987 = vsyncpa %s986, 1

</llo_original>
